<compile_context>
chip_gen: v5e
topology: v5e:2x2
jax: 0.10.0
libtpu: 0.0.40
codegen_flags: <defaults>
</compile_context>

<pallas_src>
import functools

import jax
import jax.numpy as jnp
from jax.experimental import pallas as pl
from jax.experimental.pallas import tpu as pltpu


LN_EPS = 1e-5  # PyTorch nn.LayerNorm default


def _round_up(x, m):
    return ((x + m - 1) // m) * m


def _layer_norm(h, gamma, beta):
    # var = E[h^2] - mu^2 saves one pass over h; rsqrt goes to the EUP slot.
    mu = jnp.mean(h, axis=-1, keepdims=True)
    ms = jnp.mean(h * h, axis=-1, keepdims=True)
    inv = jax.lax.rsqrt(ms - mu * mu + LN_EPS)
    return (h - mu) * (inv * gamma) + beta


def ensemble_member_kernel(s_ref, a_ref,
                           w1s_ref, w1a_ref, b1_ref, g1_ref, be1_ref,
                           w2_ref, b2_ref, g2_ref, be2_ref,
                           w3_ref, b3_ref,
                           out_ref):
    """One (batch_tile, ensemble_member) grid step: full member MLP in VMEM."""
    s = s_ref[...]
    a = a_ref[...]

    # ---- Layer 1: concat(state, action) @ W1 == state@W1_s + action@W1_a ----
    h = jnp.dot(s, w1s_ref[0], preferred_element_type=jnp.float32)
    h = h + jnp.dot(a, w1a_ref[0], preferred_element_type=jnp.float32)
    h = h + b1_ref[0]
    h = jnp.maximum(h, 0.0)
    h = _layer_norm(h, g1_ref[0], be1_ref[0])

    # ---- Layer 2: Linear -> ReLU -> LayerNorm ----
    h = jnp.dot(h, w2_ref[0], preferred_element_type=jnp.float32) + b2_ref[0]
    h = jnp.maximum(h, 0.0)
    h = _layer_norm(h, g2_ref[0], be2_ref[0])

    # ---- Head: Linear(H2, 1) ----
    q = jnp.dot(h, w3_ref[0], preferred_element_type=jnp.float32) + b3_ref[0]
    out_ref[0] = q.astype(out_ref.dtype)


def _ensemble_forward_impl(state, action, params):
    E, S, H1 = params["w1_s"].shape
    A = params["w1_a"].shape[1]
    H2 = params["w2"].shape[2]
    B = state.shape[0]

    # Batch tiling: large batches get pipelined 512-row tiles; small batches
    # run as a single (sublane-padded) tile.
    tb = 512 if B >= 512 else _round_up(B, 8)
    pb = _round_up(B, tb)
    if pb != B:
        pad = pb - B
        state = jnp.pad(state, ((0, pad), (0, 0)))
        action = jnp.pad(action, ((0, pad), (0, 0)))
    nb = pb // tb

    # Ensemble axis innermost => state/action tiles are DMA'd once per batch
    # tile and re-used across all members.
    grid = (nb, E)

    in_specs = [
        pl.BlockSpec((tb, S), lambda i, e: (i, 0)),        # state tile
        pl.BlockSpec((tb, A), lambda i, e: (i, 0)),        # action tile
        pl.BlockSpec((1, S, H1), lambda i, e: (e, 0, 0)),  # w1_s
        pl.BlockSpec((1, A, H1), lambda i, e: (e, 0, 0)),  # w1_a
        pl.BlockSpec((1, 1, H1), lambda i, e: (e, 0, 0)),  # b1
        pl.BlockSpec((1, 1, H1), lambda i, e: (e, 0, 0)),  # g1
        pl.BlockSpec((1, 1, H1), lambda i, e: (e, 0, 0)),  # be1
        pl.BlockSpec((1, H1, H2), lambda i, e: (e, 0, 0)), # w2
        pl.BlockSpec((1, 1, H2), lambda i, e: (e, 0, 0)),  # b2
        pl.BlockSpec((1, 1, H2), lambda i, e: (e, 0, 0)),  # g2
        pl.BlockSpec((1, 1, H2), lambda i, e: (e, 0, 0)),  # be2
        pl.BlockSpec((1, H2, 1), lambda i, e: (e, 0, 0)),  # w3
        pl.BlockSpec((1, 1, 1), lambda i, e: (e, 0, 0)),   # b3
    ]
    out_spec = pl.BlockSpec((1, tb, 1), lambda i, e: (e, i, 0))

    outs = pl.pallas_call(
        ensemble_member_kernel,
        out_shape=jax.ShapeDtypeStruct((E, pb, 1), jnp.float32),
        grid=grid,
        in_specs=in_specs,
        out_specs=out_spec,
        compiler_params=pltpu.CompilerParams(
            dimension_semantics=("parallel", "parallel")),
    )(state, action,
      params["w1_s"], params["w1_a"], params["b1"], params["g1"], params["be1"],
      params["w2"], params["b2"], params["g2"], params["be2"],
      params["w3"], params["b3"])

    outs = outs[:, :B, :]                         # (E, B, 1) stacked member outputs
    mean = jnp.mean(outs, axis=0)                 # (B, 1)
    std = jnp.std(outs, axis=0, ddof=1)           # unbiased, matches torch.std default
    return mean, std


ensemble_forward = jax.jit(_ensemble_forward_impl)


# ----------------------------- parameter init -----------------------------

def _xavier_uniform(key, shape, fan_in, fan_out):
    # matches torch.nn.init.xavier_uniform_ (gain=1); stored as (E, in, out)
    bound = (6.0 / (fan_in + fan_out)) ** 0.5
    return jax.random.uniform(key, shape, minval=-bound, maxval=bound,
                              dtype=jnp.float32)


def init_ensemble_params(key, state_dim, action_dim, num_networks=3,
                         hidden_dims=(256, 256)):
    h1, h2 = hidden_dims
    d_in = state_dim + action_dim
    k1, k2, k3 = jax.random.split(key, 3)
    w1 = _xavier_uniform(k1, (num_networks, d_in, h1), d_in, h1)
    return {
        "w1_s": w1[:, :state_dim, :],
        "w1_a": w1[:, state_dim:, :],
        "b1": jnp.zeros((num_networks, 1, h1), jnp.float32),
        "g1": jnp.ones((num_networks, 1, h1), jnp.float32),
        "be1": jnp.zeros((num_networks, 1, h1), jnp.float32),
        "w2": _xavier_uniform(k2, (num_networks, h1, h2), h1, h2),
        "b2": jnp.zeros((num_networks, 1, h2), jnp.float32),
        "g2": jnp.ones((num_networks, 1, h2), jnp.float32),
        "be2": jnp.zeros((num_networks, 1, h2), jnp.float32),
        "w3": _xavier_uniform(k3, (num_networks, h2, 1), h2, 1),
        "b3": jnp.zeros((num_networks, 1, 1), jnp.float32),
    }


# sample_network(): host-side random member selection (not a forward-pass op).
def sample_network_index(num_networks, seed=0):
    return int(jax.random.randint(jax.random.PRNGKey(seed), (), 0, num_networks))


# ----------------------------- pure-JAX reference -----------------------------

def _ref_member(x, p, e):
    w1 = jnp.concatenate([p["w1_s"][e], p["w1_a"][e]], axis=0)

    def ln(h, g, b):
        mu = h.mean(-1, keepdims=True)
        var = ((h - mu) ** 2).mean(-1, keepdims=True)
        return (h - mu) / jnp.sqrt(var + LN_EPS) * g + b

    h = jnp.maximum(x @ w1 + p["b1"][e], 0.0)
    h = ln(h, p["g1"][e], p["be1"][e])
    h = jnp.maximum(h @ p["w2"][e] + p["b2"][e], 0.0)
    h = ln(h, p["g2"][e], p["be2"][e])
    return h @ p["w3"][e] + p["b3"][e]


def _ref_ensemble(state, action, p):
    x = jnp.concatenate([state, action], axis=-1)
    E = p["w1_s"].shape[0]
    outs = jnp.stack([_ref_member(x, p, e) for e in range(E)], axis=0)
    return outs.mean(axis=0), outs.std(axis=0, ddof=1)


if __name__ == "__main__":
    state_dim, action_dim = 16, 8
    batch = 8
    num_networks = 3

    key = jax.random.PRNGKey(0)
    k_s, k_a, k_p = jax.random.split(key, 3)
    state = jax.random.normal(k_s, (batch, state_dim), dtype=jnp.float32)
    action = jax.random.normal(k_a, (batch, action_dim), dtype=jnp.float32)
    params = init_ensemble_params(k_p, state_dim, action_dim, num_networks)

    mean, std = ensemble_forward(state, action, params)
    jax.block_until_ready((mean, std))

    ref_mean, ref_std = _ref_ensemble(state, action, params)
    assert mean.shape == (batch, 1) and std.shape == (batch, 1)
    assert jnp.allclose(mean, ref_mean, atol=1e-3, rtol=1e-3)
    assert jnp.allclose(std, ref_std, atol=1e-3, rtol=1e-3)

    print("KERNEL_OK")
</pallas_src>

<mosaic_0001>
module attributes {stable_mosaic.version = 11 : i64} {
  func.func @ensemble_member_kernel(%arg0: i32, %arg1: i32, %arg2: memref<8x16xf32, #tpu.memory_space<vmem>>, %arg3: memref<8x8xf32, #tpu.memory_space<vmem>>, %arg4: memref<1x16x256xf32, #tpu.memory_space<vmem>>, %arg5: memref<1x8x256xf32, #tpu.memory_space<vmem>>, %arg6: memref<1x1x256xf32, #tpu.memory_space<vmem>>, %arg7: memref<1x1x256xf32, #tpu.memory_space<vmem>>, %arg8: memref<1x1x256xf32, #tpu.memory_space<vmem>>, %arg9: memref<1x256x256xf32, #tpu.memory_space<vmem>>, %arg10: memref<1x1x256xf32, #tpu.memory_space<vmem>>, %arg11: memref<1x1x256xf32, #tpu.memory_space<vmem>>, %arg12: memref<1x1x256xf32, #tpu.memory_space<vmem>>, %arg13: memref<1x256x1xf32, #tpu.memory_space<vmem>>, %arg14: memref<1x1x1xf32, #tpu.memory_space<vmem>>, %arg15: memref<1x8x1xf32, #tpu.memory_space<vmem>>) attributes {dimension_semantics = [#tpu.dimension_semantics<parallel>, #tpu.dimension_semantics<parallel>], iteration_bounds = array<i64: 1, 3>, scalar_prefetch = 0 : i64, scratch_operands = 0 : i64, tpu.core_type = #tpu.core_type<tc>, window_params = [{transform_indices = @transform_0, window_bounds = array<i64: 8, 16>}, {transform_indices = @transform_1, window_bounds = array<i64: 8, 8>}, {transform_indices = @transform_2, window_bounds = array<i64: 1, 16, 256>}, {transform_indices = @transform_3, window_bounds = array<i64: 1, 8, 256>}, {transform_indices = @transform_4, window_bounds = array<i64: 1, 1, 256>}, {transform_indices = @transform_5, window_bounds = array<i64: 1, 1, 256>}, {transform_indices = @transform_6, window_bounds = array<i64: 1, 1, 256>}, {transform_indices = @transform_7, window_bounds = array<i64: 1, 256, 256>}, {transform_indices = @transform_8, window_bounds = array<i64: 1, 1, 256>}, {transform_indices = @transform_9, window_bounds = array<i64: 1, 1, 256>}, {transform_indices = @transform_10, window_bounds = array<i64: 1, 1, 256>}, {transform_indices = @transform_11, window_bounds = array<i64: 1, 256, 1>}, {transform_indices = @transform_12, window_bounds = array<i64: 1, 1, 1>}, {transform_indices = @transform_13, window_bounds = array<i64: 1, 8, 1>}]} {
    %c0 = arith.constant 0 : index
    %c0_0 = arith.constant 0 : index
    %0 = vector.load %arg2[%c0, %c0_0] : memref<8x16xf32, #tpu.memory_space<vmem>>, vector<8x16xf32>
    %c0_1 = arith.constant 0 : index
    %c0_2 = arith.constant 0 : index
    %1 = vector.load %arg3[%c0_1, %c0_2] : memref<8x8xf32, #tpu.memory_space<vmem>>, vector<8x8xf32>
    %c0_3 = arith.constant 0 : index
    %c0_4 = arith.constant 0 : index
    %c0_5 = arith.constant 0 : index
    %2 = vector.load %arg4[%c0_3, %c0_4, %c0_5] : memref<1x16x256xf32, #tpu.memory_space<vmem>>, vector<1x16x256xf32>
    %3 = vector.shape_cast %2 : vector<1x16x256xf32> to vector<16x256xf32>
    %cst = arith.constant dense<0.000000e+00> : vector<8x256xf32>
    %4 = tpu.matmul %0, %3, %cst {dimension_numbers = #tpu.dot_dimension_numbers<[1], [0], [0], [1], [0, 0, 1, 1], [], []>} : vector<8x16xf32>, vector<16x256xf32>, vector<8x256xf32> -> vector<8x256xf32>
    %c0_6 = arith.constant 0 : index
    %c0_7 = arith.constant 0 : index
    %c0_8 = arith.constant 0 : index
    %5 = vector.load %arg5[%c0_6, %c0_7, %c0_8] : memref<1x8x256xf32, #tpu.memory_space<vmem>>, vector<1x8x256xf32>
    %6 = vector.shape_cast %5 : vector<1x8x256xf32> to vector<8x256xf32>
    %cst_9 = arith.constant dense<0.000000e+00> : vector<8x256xf32>
    %7 = tpu.matmul %1, %6, %cst_9 {dimension_numbers = #tpu.dot_dimension_numbers<[1], [0], [0], [1], [0, 0, 1, 1], [], []>} : vector<8x8xf32>, vector<8x256xf32>, vector<8x256xf32> -> vector<8x256xf32>
    %8 = arith.addf %4, %7 : vector<8x256xf32>
    %c0_10 = arith.constant 0 : index
    %c0_11 = arith.constant 0 : index
    %c0_12 = arith.constant 0 : index
    %9 = vector.load %arg6[%c0_10, %c0_11, %c0_12] : memref<1x1x256xf32, #tpu.memory_space<vmem>>, vector<1x1x256xf32>
    %10 = vector.shape_cast %9 : vector<1x1x256xf32> to vector<1x256xf32>
    %11 = vector.broadcast %10 : vector<1x256xf32> to vector<8x256xf32>
    %12 = arith.addf %8, %11 : vector<8x256xf32>
    %cst_13 = arith.constant 0.000000e+00 : f32
    %13 = vector.broadcast %cst_13 : f32 to vector<8x256xf32>
    %14 = arith.maximumf %12, %13 : vector<8x256xf32>
    %c0_14 = arith.constant 0 : index
    %c0_15 = arith.constant 0 : index
    %c0_16 = arith.constant 0 : index
    %15 = vector.load %arg7[%c0_14, %c0_15, %c0_16] : memref<1x1x256xf32, #tpu.memory_space<vmem>>, vector<1x1x256xf32>
    %16 = vector.shape_cast %15 : vector<1x1x256xf32> to vector<1x256xf32>
    %c0_17 = arith.constant 0 : index
    %c0_18 = arith.constant 0 : index
    %c0_19 = arith.constant 0 : index
    %17 = vector.load %arg8[%c0_17, %c0_18, %c0_19] : memref<1x1x256xf32, #tpu.memory_space<vmem>>, vector<1x1x256xf32>
    %18 = vector.shape_cast %17 : vector<1x1x256xf32> to vector<1x256xf32>
    %cst_20 = arith.constant dense<0.000000e+00> : vector<8xf32>
    %19 = vector.multi_reduction <add>, %14, %cst_20 [1] : vector<8x256xf32> to vector<8xf32>
    %20 = vector.shape_cast %19 : vector<8xf32> to vector<8x1xf32>
    %cst_21 = arith.constant 2.560000e+02 : f32
    %21 = vector.broadcast %cst_21 : f32 to vector<8x1xf32>
    %22 = arith.divf %20, %21 : vector<8x1xf32>
    %23 = arith.mulf %14, %14 : vector<8x256xf32>
    %cst_22 = arith.constant dense<0.000000e+00> : vector<8xf32>
    %24 = vector.multi_reduction <add>, %23, %cst_22 [1] : vector<8x256xf32> to vector<8xf32>
    %25 = vector.shape_cast %24 : vector<8xf32> to vector<8x1xf32>
    %cst_23 = arith.constant 2.560000e+02 : f32
    %26 = vector.broadcast %cst_23 : f32 to vector<8x1xf32>
    %27 = arith.divf %25, %26 : vector<8x1xf32>
    %28 = arith.mulf %22, %22 : vector<8x1xf32>
    %29 = arith.subf %27, %28 : vector<8x1xf32>
    %cst_24 = arith.constant 9.99999974E-6 : f32
    %30 = vector.broadcast %cst_24 : f32 to vector<8x1xf32>
    %31 = arith.addf %29, %30 : vector<8x1xf32>
    %32 = math.rsqrt %31 : vector<8x1xf32>
    %33 = vector.broadcast %22 : vector<8x1xf32> to vector<8x256xf32>
    %34 = arith.subf %14, %33 : vector<8x256xf32>
    %35 = vector.broadcast %32 : vector<8x1xf32> to vector<8x256xf32>
    %36 = vector.broadcast %16 : vector<1x256xf32> to vector<8x256xf32>
    %37 = arith.mulf %35, %36 : vector<8x256xf32>
    %38 = arith.mulf %34, %37 : vector<8x256xf32>
    %39 = vector.broadcast %18 : vector<1x256xf32> to vector<8x256xf32>
    %40 = arith.addf %38, %39 : vector<8x256xf32>
    %c0_25 = arith.constant 0 : index
    %c0_26 = arith.constant 0 : index
    %c0_27 = arith.constant 0 : index
    %41 = vector.load %arg9[%c0_25, %c0_26, %c0_27] : memref<1x256x256xf32, #tpu.memory_space<vmem>>, vector<1x256x256xf32>
    %42 = vector.shape_cast %41 : vector<1x256x256xf32> to vector<256x256xf32>
    %cst_28 = arith.constant dense<0.000000e+00> : vector<8x256xf32>
    %43 = tpu.matmul %40, %42, %cst_28 {dimension_numbers = #tpu.dot_dimension_numbers<[1], [0], [0], [1], [0, 0, 1, 1], [], []>} : vector<8x256xf32>, vector<256x256xf32>, vector<8x256xf32> -> vector<8x256xf32>
    %c0_29 = arith.constant 0 : index
    %c0_30 = arith.constant 0 : index
    %c0_31 = arith.constant 0 : index
    %44 = vector.load %arg10[%c0_29, %c0_30, %c0_31] : memref<1x1x256xf32, #tpu.memory_space<vmem>>, vector<1x1x256xf32>
    %45 = vector.shape_cast %44 : vector<1x1x256xf32> to vector<1x256xf32>
    %46 = vector.broadcast %45 : vector<1x256xf32> to vector<8x256xf32>
    %47 = arith.addf %43, %46 : vector<8x256xf32>
    %cst_32 = arith.constant 0.000000e+00 : f32
    %48 = vector.broadcast %cst_32 : f32 to vector<8x256xf32>
    %49 = arith.maximumf %47, %48 : vector<8x256xf32>
    %c0_33 = arith.constant 0 : index
    %c0_34 = arith.constant 0 : index
    %c0_35 = arith.constant 0 : index
    %50 = vector.load %arg11[%c0_33, %c0_34, %c0_35] : memref<1x1x256xf32, #tpu.memory_space<vmem>>, vector<1x1x256xf32>
    %51 = vector.shape_cast %50 : vector<1x1x256xf32> to vector<1x256xf32>
    %c0_36 = arith.constant 0 : index
    %c0_37 = arith.constant 0 : index
    %c0_38 = arith.constant 0 : index
    %52 = vector.load %arg12[%c0_36, %c0_37, %c0_38] : memref<1x1x256xf32, #tpu.memory_space<vmem>>, vector<1x1x256xf32>
    %53 = vector.shape_cast %52 : vector<1x1x256xf32> to vector<1x256xf32>
    %cst_39 = arith.constant dense<0.000000e+00> : vector<8xf32>
    %54 = vector.multi_reduction <add>, %49, %cst_39 [1] : vector<8x256xf32> to vector<8xf32>
    %55 = vector.shape_cast %54 : vector<8xf32> to vector<8x1xf32>
    %cst_40 = arith.constant 2.560000e+02 : f32
    %56 = vector.broadcast %cst_40 : f32 to vector<8x1xf32>
    %57 = arith.divf %55, %56 : vector<8x1xf32>
    %58 = arith.mulf %49, %49 : vector<8x256xf32>
    %cst_41 = arith.constant dense<0.000000e+00> : vector<8xf32>
    %59 = vector.multi_reduction <add>, %58, %cst_41 [1] : vector<8x256xf32> to vector<8xf32>
    %60 = vector.shape_cast %59 : vector<8xf32> to vector<8x1xf32>
    %cst_42 = arith.constant 2.560000e+02 : f32
    %61 = vector.broadcast %cst_42 : f32 to vector<8x1xf32>
    %62 = arith.divf %60, %61 : vector<8x1xf32>
    %63 = arith.mulf %57, %57 : vector<8x1xf32>
    %64 = arith.subf %62, %63 : vector<8x1xf32>
    %cst_43 = arith.constant 9.99999974E-6 : f32
    %65 = vector.broadcast %cst_43 : f32 to vector<8x1xf32>
    %66 = arith.addf %64, %65 : vector<8x1xf32>
    %67 = math.rsqrt %66 : vector<8x1xf32>
    %68 = vector.broadcast %57 : vector<8x1xf32> to vector<8x256xf32>
    %69 = arith.subf %49, %68 : vector<8x256xf32>
    %70 = vector.broadcast %67 : vector<8x1xf32> to vector<8x256xf32>
    %71 = vector.broadcast %51 : vector<1x256xf32> to vector<8x256xf32>
    %72 = arith.mulf %70, %71 : vector<8x256xf32>
    %73 = arith.mulf %69, %72 : vector<8x256xf32>
    %74 = vector.broadcast %53 : vector<1x256xf32> to vector<8x256xf32>
    %75 = arith.addf %73, %74 : vector<8x256xf32>
    %c0_44 = arith.constant 0 : index
    %c0_45 = arith.constant 0 : index
    %c0_46 = arith.constant 0 : index
    %76 = vector.load %arg13[%c0_44, %c0_45, %c0_46] : memref<1x256x1xf32, #tpu.memory_space<vmem>>, vector<1x256x1xf32>
    %77 = vector.shape_cast %76 : vector<1x256x1xf32> to vector<256x1xf32>
    %cst_47 = arith.constant dense<0.000000e+00> : vector<8x1xf32>
    %78 = tpu.matmul %75, %77, %cst_47 {dimension_numbers = #tpu.dot_dimension_numbers<[1], [0], [0], [1], [0, 0, 1, 1], [], []>} : vector<8x256xf32>, vector<256x1xf32>, vector<8x1xf32> -> vector<8x1xf32>
    %c0_48 = arith.constant 0 : index
    %c0_49 = arith.constant 0 : index
    %c0_50 = arith.constant 0 : index
    %79 = vector.load %arg14[%c0_48, %c0_49, %c0_50] : memref<1x1x1xf32, #tpu.memory_space<vmem>>, vector<1x1x1xf32>
    %80 = vector.shape_cast %79 : vector<1x1x1xf32> to vector<1x1xf32>
    %81 = vector.broadcast %80 : vector<1x1xf32> to vector<8x1xf32>
    %82 = arith.addf %78, %81 : vector<8x1xf32>
    %c0_51 = arith.constant 0 : index
    %c0_52 = arith.constant 0 : index
    %c0_53 = arith.constant 0 : index
    %83 = vector.load %arg15[%c0_51, %c0_52, %c0_53] : memref<1x8x1xf32, #tpu.memory_space<vmem>>, vector<1x8x1xf32>
    %84 = vector.shape_cast %83 : vector<1x8x1xf32> to vector<8x1xf32>
    %85 = vector.shape_cast %82 : vector<8x1xf32> to vector<1x8x1xf32>
    tpu.vector_store %arg15[%c0_51, %c0_52, %c0_53], %85 {strides = array<i32>} : memref<1x8x1xf32, #tpu.memory_space<vmem>>, vector<1x8x1xf32>,
    return
  }
  func.func @transform_0(%arg0: i32, %arg1: i32) -> (i32, i32) {
    %c0_i32 = arith.constant 0 : i32
    %c0_i32_0 = arith.constant 0 : i32
    return %arg0, %c0_i32 : i32, i32
  }
  func.func @transform_1(%arg0: i32, %arg1: i32) -> (i32, i32) {
    %c0_i32 = arith.constant 0 : i32
    %c0_i32_0 = arith.constant 0 : i32
    return %arg0, %c0_i32 : i32, i32
  }
  func.func @transform_2(%arg0: i32, %arg1: i32) -> (i32, i32, i32) {
    %c0_i32 = arith.constant 0 : i32
    %c0_i32_0 = arith.constant 0 : i32
    %c0_i32_1 = arith.constant 0 : i32
    return %arg1, %c0_i32, %c0_i32_0 : i32, i32, i32
  }
  func.func @transform_3(%arg0: i32, %arg1: i32) -> (i32, i32, i32) {
    %c0_i32 = arith.constant 0 : i32
    %c0_i32_0 = arith.constant 0 : i32
    %c0_i32_1 = arith.constant 0 : i32
    return %arg1, %c0_i32, %c0_i32_0 : i32, i32, i32
  }
  func.func @transform_4(%arg0: i32, %arg1: i32) -> (i32, i32, i32) {
    %c0_i32 = arith.constant 0 : i32
    %c0_i32_0 = arith.constant 0 : i32
    %c0_i32_1 = arith.constant 0 : i32
    return %arg1, %c0_i32, %c0_i32_0 : i32, i32, i32
  }
  func.func @transform_5(%arg0: i32, %arg1: i32) -> (i32, i32, i32) {
    %c0_i32 = arith.constant 0 : i32
    %c0_i32_0 = arith.constant 0 : i32
    %c0_i32_1 = arith.constant 0 : i32
    return %arg1, %c0_i32, %c0_i32_0 : i32, i32, i32
  }
  func.func @transform_6(%arg0: i32, %arg1: i32) -> (i32, i32, i32) {
    %c0_i32 = arith.constant 0 : i32
    %c0_i32_0 = arith.constant 0 : i32
    %c0_i32_1 = arith.constant 0 : i32
    return %arg1, %c0_i32, %c0_i32_0 : i32, i32, i32
  }
  func.func @transform_7(%arg0: i32, %arg1: i32) -> (i32, i32, i32) {
    %c0_i32 = arith.constant 0 : i32
    %c0_i32_0 = arith.constant 0 : i32
    %c0_i32_1 = arith.constant 0 : i32
    return %arg1, %c0_i32, %c0_i32_0 : i32, i32, i32
  }
  func.func @transform_8(%arg0: i32, %arg1: i32) -> (i32, i32, i32) {
    %c0_i32 = arith.constant 0 : i32
    %c0_i32_0 = arith.constant 0 : i32
    %c0_i32_1 = arith.constant 0 : i32
    return %arg1, %c0_i32, %c0_i32_0 : i32, i32, i32
  }
  func.func @transform_9(%arg0: i32, %arg1: i32) -> (i32, i32, i32) {
    %c0_i32 = arith.constant 0 : i32
    %c0_i32_0 = arith.constant 0 : i32
    %c0_i32_1 = arith.constant 0 : i32
    return %arg1, %c0_i32, %c0_i32_0 : i32, i32, i32
  }
  func.func @transform_10(%arg0: i32, %arg1: i32) -> (i32, i32, i32) {
    %c0_i32 = arith.constant 0 : i32
    %c0_i32_0 = arith.constant 0 : i32
    %c0_i32_1 = arith.constant 0 : i32
    return %arg1, %c0_i32, %c0_i32_0 : i32, i32, i32
  }
  func.func @transform_11(%arg0: i32, %arg1: i32) -> (i32, i32, i32) {
    %c0_i32 = arith.constant 0 : i32
    %c0_i32_0 = arith.constant 0 : i32
    %c0_i32_1 = arith.constant 0 : i32
    return %arg1, %c0_i32, %c0_i32_0 : i32, i32, i32
  }
  func.func @transform_12(%arg0: i32, %arg1: i32) -> (i32, i32, i32) {
    %c0_i32 = arith.constant 0 : i32
    %c0_i32_0 = arith.constant 0 : i32
    %c0_i32_1 = arith.constant 0 : i32
    return %arg1, %c0_i32, %c0_i32_0 : i32, i32, i32
  }
  func.func @transform_13(%arg0: i32, %arg1: i32) -> (i32, i32, i32) {
    %c0_i32 = arith.constant 0 : i32
    %c0_i32_0 = arith.constant 0 : i32
    return %arg1, %arg0, %c0_i32 : i32, i32, i32
  }
}

</mosaic_0001>

<llo_original>
// kernel: _ensemble_forward_impl.1
$region0: #{_ensemble_forward_impl.1}
  #allocation0 [shape = 'u32[]', space=smem, size = 0x4, offset = 0x4, fixed_abs, tag = 'smem constant byte address 0x4 - core index']
  #allocation1 [shape = 'u32[72,128]{1,0:T(1,128)}', space=vmem, size = 0x9000, scoped, tag = 'internal scratch']
  %s0 = inlined_call_operand.vmem [shape: f32[8,16], index: 0, kind: input, shape index: {}]
  %s1 = inlined_call_operand.vmem [shape: f32[8,8], index: 1, kind: input, shape index: {}]
  %s2 = inlined_call_operand.vmem [shape: f32[3,16,256], index: 2, kind: input, shape index: {}]
  %s3 = inlined_call_operand.vmem [shape: f32[3,8,256], index: 3, kind: input, shape index: {}]
  %s4 = inlined_call_operand.vmem [shape: f32[3,1,256], index: 4, kind: input, shape index: {}]
  %s5 = inlined_call_operand.vmem [shape: f32[3,1,256], index: 5, kind: input, shape index: {}]
  %s6 = inlined_call_operand.vmem [shape: f32[3,1,256], index: 6, kind: input, shape index: {}]
  %s7 = inlined_call_operand.hbm [shape: f32[3,256,256], index: 7, kind: input, shape index: {}]
  %s8 = inlined_call_operand.vmem [shape: f32[3,1,256], index: 8, kind: input, shape index: {}]
  %s9 = inlined_call_operand.vmem [shape: f32[3,1,256], index: 9, kind: input, shape index: {}]
  %s10 = inlined_call_operand.vmem [shape: f32[3,1,256], index: 10, kind: input, shape index: {}]
  %s11 = inlined_call_operand.vmem [shape: f32[3,256,1], index: 11, kind: input, shape index: {}]
  %s12 = inlined_call_operand.vmem [shape: f32[3,1,1], index: 12, kind: input, shape index: {}]
  %s13 = inlined_call_operand.vmem [shape: f32[3,8,1], index: 13, kind: output, shape index: {}]
  %s14 = sld [smem:[#allocation0]]
  $region89: #{_ensemble_forward_impl.1} parent=0
    _
  %s16 = ssub.s32 1, %s14
  %s17 = scalar_select 0, %s16, %s14
  $region1: #{_ensemble_forward_impl.1} parent=0
    #allocation2 [shape = 'u8[524288]{0}', space=vmem, size = 0x80000, scoped, tag = 'input window, operand 7']
    #allocation3 [shape = 's32[2]{0}', space=sflag, size = 0x8, scoped, tag = 'scoped memory for _ensemble_forward_impl.1']
    %18 = vsyncpa [#allocation3], 0
    %s19 = scalar_lea.sflag [#allocation3], 1
    %20 = vsyncpa %s19, 0
    loop: start=0, step=1, limit=5
    $region2: #{_ensemble_forward_impl.1} parent=1 // loop_pre_header
      _
    $region3: #{_ensemble_forward_impl.1} parent=1 // loop_header
      %s22 = sphi 0, %s26
      %p23 = scmp.ge.s32.totalorder %s22, 5
      %s29 = sphi 0, %s41
      %s30 = sphi 0, %s37
      %s31 = sphi 0, %s29
      %s32 = sphi 0, %s30
      %s33 = sphi 0, %s31
      %s34 = sphi 0, %s32
      %s44 = sphi 0, %s46
      %s47 = sphi 0, %s44
      %s48 = sphi 0, %s47
      %s64 = sphi 0, %s48
      %s70 = sphi 0, %s72
      %s73 = sphi 0, %s70
      %s74 = sphi 0, %s73
      %s90 = sphi 0, %s74
      %s96 = sphi 0, %s98
      %s99 = sphi 0, %s96
      %s100 = sphi 0, %s99
      %s116 = sphi 0, %s100
      %s122 = sphi 0, %s124
      %s125 = sphi 0, %s122
      %s126 = sphi 0, %s125
      %s142 = sphi 0, %s126
      %s148 = sphi 0, %s150
      %s151 = sphi 0, %s148
      %s152 = sphi 0, %s151
      %s168 = sphi 0, %s152
      %s174 = sphi 0, %s176
      %s177 = sphi 0, %s174
      %s178 = sphi 0, %s177
      %s194 = sphi 0, %s178
      %s200 = sphi 0, %s202
      %s203 = sphi 0, %s200
      %s204 = sphi 0, %s203
      %s220 = sphi 0, %s204
      %s226 = sphi 0, %s228
      %s229 = sphi 0, %s226
      %s230 = sphi 0, %s229
      %s246 = sphi 0, %s230
      %s252 = sphi 0, %s254
      %s255 = sphi 0, %s252
      %s256 = sphi 0, %s255
      %s272 = sphi 0, %s256
      %s278 = sphi 0, %s280
      %s281 = sphi 0, %s278
      %s282 = sphi 0, %s281
      %s298 = sphi 0, %s282
      %s304 = sphi 0, %s306
      %s307 = sphi 0, %s304
      %s308 = sphi 0, %s307
      %s324 = sphi 0, %s308
      %s330 = sphi 0, %s332
      %s333 = sphi 0, %s330
      %s334 = sphi 0, %s333
      %s350 = sphi 0, %s334
      %s356 = sphi 0, %s358
      %s359 = sphi 0, %s356
      %s360 = sphi 0, %s359
      %s376 = sphi 0, %s360
      %s384 = sphi 0, %s386
      %s387 = sphi 0, %s384
      %s388 = sphi 0, %s387
      %s404 = sphi 0, %s388
    $region4: #{_ensemble_forward_impl.1} parent=1 // loop_header_branch
      %25 = sbr.rel (%p23) target = $region8
    $region5: #{_ensemble_forward_impl.1} parent=1 // loop_body
      %s27 = ssub.s32 %s22, 1
      %s28 = ssub.s32 %s22, 2
      %s35 = sadd.s32 1, %s30
      %p36 = scmp.ge.s32.totalorder %s35, 3
      %s37 = scalar_select %p36, 0, %s35
      %s38 = sadd.s32 1, %s29
      %s39 = scalar_select %p36, %s38, %s29
      %p40 = scmp.ge.s32.totalorder %s39, 1
      %s41 = scalar_select %p40, 0, %s39
      %s42 = ssub.s32 %s29, %s41
      %p43 = scmp.eq.s32.totalorder %s42, 0
      %s45 = sadd.s32 %s44, 1
      %s46 = scalar_select %p43, %s44, %s45
      %p49 = pneg %p43
      %p50 = scmp.eq.s32.totalorder %s22, 2
      %p51 = por %p49, %p50
      %p52 = scmp.ne.s32.totalorder %s44, %s47
      %p53 = scmp.eq.s32.totalorder %s22, 0
      %p54 = por %p52, %p53
      %p55 = scmp.ne.s32.totalorder %s44, %s47
      %p56 = scmp.eq.s32.totalorder %s27, 2
      %p57 = por %p55, %p56
      %p58 = scmp.ne.s32.totalorder %s47, %s48
      %p59 = scmp.eq.s32.totalorder %s27, 0
      %p60 = por %p58, %p59
      %p61 = scmp.ne.s32.totalorder %s47, %s48
      %p62 = scmp.eq.s32.totalorder %s28, 2
      %p63 = por %p61, %p62
      %p65 = scmp.ne.s32.totalorder %s48, %s64
      %p66 = scmp.eq.s32.totalorder %s28, 0
      %p67 = por %p65, %p66
      %s68 = ssub.s32 %s29, %s41
      %p69 = scmp.eq.s32.totalorder %s68, 0
      %s71 = sadd.s32 %s70, 1
      %s72 = scalar_select %p69, %s70, %s71
      %p75 = pneg %p69
      %p76 = scmp.eq.s32.totalorder %s22, 2
      %p77 = por %p75, %p76
      %p78 = scmp.ne.s32.totalorder %s70, %s73
      %p79 = scmp.eq.s32.totalorder %s22, 0
      %p80 = por %p78, %p79
      %p81 = scmp.ne.s32.totalorder %s70, %s73
      %p82 = scmp.eq.s32.totalorder %s27, 2
      %p83 = por %p81, %p82
      %p84 = scmp.ne.s32.totalorder %s73, %s74
      %p85 = scmp.eq.s32.totalorder %s27, 0
      %p86 = por %p84, %p85
      %p87 = scmp.ne.s32.totalorder %s73, %s74
      %p88 = scmp.eq.s32.totalorder %s28, 2
      %p89 = por %p87, %p88
      %p91 = scmp.ne.s32.totalorder %s74, %s90
      %p92 = scmp.eq.s32.totalorder %s28, 0
      %p93 = por %p91, %p92
      %s94 = ssub.s32 %s30, %s37
      %p95 = scmp.eq.s32.totalorder %s94, 0
      %s97 = sadd.s32 %s96, 1
      %s98 = scalar_select %p95, %s96, %s97
      %p101 = pneg %p95
      %p102 = scmp.eq.s32.totalorder %s22, 2
      %p103 = por %p101, %p102
      %p104 = scmp.ne.s32.totalorder %s96, %s99
      %p105 = scmp.eq.s32.totalorder %s22, 0
      %p106 = por %p104, %p105
      %p107 = scmp.ne.s32.totalorder %s96, %s99
      %p108 = scmp.eq.s32.totalorder %s27, 2
      %p109 = por %p107, %p108
      %p110 = scmp.ne.s32.totalorder %s99, %s100
      %p111 = scmp.eq.s32.totalorder %s27, 0
      %p112 = por %p110, %p111
      %p113 = scmp.ne.s32.totalorder %s99, %s100
      %p114 = scmp.eq.s32.totalorder %s28, 2
      %p115 = por %p113, %p114
      %p117 = scmp.ne.s32.totalorder %s100, %s116
      %p118 = scmp.eq.s32.totalorder %s28, 0
      %p119 = por %p117, %p118
      %s120 = ssub.s32 %s30, %s37
      %p121 = scmp.eq.s32.totalorder %s120, 0
      %s123 = sadd.s32 %s122, 1
      %s124 = scalar_select %p121, %s122, %s123
      %p127 = pneg %p121
      %p128 = scmp.eq.s32.totalorder %s22, 2
      %p129 = por %p127, %p128
      %p130 = scmp.ne.s32.totalorder %s122, %s125
      %p131 = scmp.eq.s32.totalorder %s22, 0
      %p132 = por %p130, %p131
      %p133 = scmp.ne.s32.totalorder %s122, %s125
      %p134 = scmp.eq.s32.totalorder %s27, 2
      %p135 = por %p133, %p134
      %p136 = scmp.ne.s32.totalorder %s125, %s126
      %p137 = scmp.eq.s32.totalorder %s27, 0
      %p138 = por %p136, %p137
      %p139 = scmp.ne.s32.totalorder %s125, %s126
      %p140 = scmp.eq.s32.totalorder %s28, 2
      %p141 = por %p139, %p140
      %p143 = scmp.ne.s32.totalorder %s126, %s142
      %p144 = scmp.eq.s32.totalorder %s28, 0
      %p145 = por %p143, %p144
      %s146 = ssub.s32 %s30, %s37
      %p147 = scmp.eq.s32.totalorder %s146, 0
      %s149 = sadd.s32 %s148, 1
      %s150 = scalar_select %p147, %s148, %s149
      %p153 = pneg %p147
      %p154 = scmp.eq.s32.totalorder %s22, 2
      %p155 = por %p153, %p154
      %p156 = scmp.ne.s32.totalorder %s148, %s151
      %p157 = scmp.eq.s32.totalorder %s22, 0
      %p158 = por %p156, %p157
      %p159 = scmp.ne.s32.totalorder %s148, %s151
      %p160 = scmp.eq.s32.totalorder %s27, 2
      %p161 = por %p159, %p160
      %p162 = scmp.ne.s32.totalorder %s151, %s152
      %p163 = scmp.eq.s32.totalorder %s27, 0
      %p164 = por %p162, %p163
      %p165 = scmp.ne.s32.totalorder %s151, %s152
      %p166 = scmp.eq.s32.totalorder %s28, 2
      %p167 = por %p165, %p166
      %p169 = scmp.ne.s32.totalorder %s152, %s168
      %p170 = scmp.eq.s32.totalorder %s28, 0
      %p171 = por %p169, %p170
      %s172 = ssub.s32 %s30, %s37
      %p173 = scmp.eq.s32.totalorder %s172, 0
      %s175 = sadd.s32 %s174, 1
      %s176 = scalar_select %p173, %s174, %s175
      %p179 = pneg %p173
      %p180 = scmp.eq.s32.totalorder %s22, 2
      %p181 = por %p179, %p180
      %p182 = scmp.ne.s32.totalorder %s174, %s177
      %p183 = scmp.eq.s32.totalorder %s22, 0
      %p184 = por %p182, %p183
      %p185 = scmp.ne.s32.totalorder %s174, %s177
      %p186 = scmp.eq.s32.totalorder %s27, 2
      %p187 = por %p185, %p186
      %p188 = scmp.ne.s32.totalorder %s177, %s178
      %p189 = scmp.eq.s32.totalorder %s27, 0
      %p190 = por %p188, %p189
      %p191 = scmp.ne.s32.totalorder %s177, %s178
      %p192 = scmp.eq.s32.totalorder %s28, 2
      %p193 = por %p191, %p192
      %p195 = scmp.ne.s32.totalorder %s178, %s194
      %p196 = scmp.eq.s32.totalorder %s28, 0
      %p197 = por %p195, %p196
      %s198 = ssub.s32 %s30, %s37
      %p199 = scmp.eq.s32.totalorder %s198, 0
      %s201 = sadd.s32 %s200, 1
      %s202 = scalar_select %p199, %s200, %s201
      %p205 = pneg %p199
      %p206 = scmp.eq.s32.totalorder %s22, 2
      %p207 = por %p205, %p206
      %p208 = scmp.ne.s32.totalorder %s200, %s203
      %p209 = scmp.eq.s32.totalorder %s22, 0
      %p210 = por %p208, %p209
      %p211 = scmp.ne.s32.totalorder %s200, %s203
      %p212 = scmp.eq.s32.totalorder %s27, 2
      %p213 = por %p211, %p212
      %p214 = scmp.ne.s32.totalorder %s203, %s204
      %p215 = scmp.eq.s32.totalorder %s27, 0
      %p216 = por %p214, %p215
      %p217 = scmp.ne.s32.totalorder %s203, %s204
      %p218 = scmp.eq.s32.totalorder %s28, 2
      %p219 = por %p217, %p218
      %p221 = scmp.ne.s32.totalorder %s204, %s220
      %p222 = scmp.eq.s32.totalorder %s28, 0
      %p223 = por %p221, %p222
      %s224 = ssub.s32 %s30, %s37
      %p225 = scmp.eq.s32.totalorder %s224, 0
      %s227 = sadd.s32 %s226, 1
      %s228 = scalar_select %p225, %s226, %s227
      %p231 = pneg %p225
      %p232 = scmp.eq.s32.totalorder %s22, 2
      %p233 = por %p231, %p232
      %p234 = scmp.ne.s32.totalorder %s226, %s229
      %p235 = scmp.eq.s32.totalorder %s22, 0
      %p236 = por %p234, %p235
      %p237 = scmp.ne.s32.totalorder %s226, %s229
      %p238 = scmp.eq.s32.totalorder %s27, 2
      %p239 = por %p237, %p238
      %p240 = scmp.ne.s32.totalorder %s229, %s230
      %p241 = scmp.eq.s32.totalorder %s27, 0
      %p242 = por %p240, %p241
      %p243 = scmp.ne.s32.totalorder %s229, %s230
      %p244 = scmp.eq.s32.totalorder %s28, 2
      %p245 = por %p243, %p244
      %p247 = scmp.ne.s32.totalorder %s230, %s246
      %p248 = scmp.eq.s32.totalorder %s28, 0
      %p249 = por %p247, %p248
      %s250 = ssub.s32 %s30, %s37
      %p251 = scmp.eq.s32.totalorder %s250, 0
      %s253 = sadd.s32 %s252, 1
      %s254 = scalar_select %p251, %s252, %s253
      %p257 = pneg %p251
      %p258 = scmp.eq.s32.totalorder %s22, 2
      %p259 = por %p257, %p258
      %p260 = scmp.ne.s32.totalorder %s252, %s255
      %p261 = scmp.eq.s32.totalorder %s22, 0
      %p262 = por %p260, %p261
      %p263 = scmp.ne.s32.totalorder %s252, %s255
      %p264 = scmp.eq.s32.totalorder %s27, 2
      %p265 = por %p263, %p264
      %p266 = scmp.ne.s32.totalorder %s255, %s256
      %p267 = scmp.eq.s32.totalorder %s27, 0
      %p268 = por %p266, %p267
      %p269 = scmp.ne.s32.totalorder %s255, %s256
      %p270 = scmp.eq.s32.totalorder %s28, 2
      %p271 = por %p269, %p270
      %p273 = scmp.ne.s32.totalorder %s256, %s272
      %p274 = scmp.eq.s32.totalorder %s28, 0
      %p275 = por %p273, %p274
      %s276 = ssub.s32 %s30, %s37
      %p277 = scmp.eq.s32.totalorder %s276, 0
      %s279 = sadd.s32 %s278, 1
      %s280 = scalar_select %p277, %s278, %s279
      %p283 = pneg %p277
      %p284 = scmp.eq.s32.totalorder %s22, 2
      %p285 = por %p283, %p284
      %p286 = scmp.ne.s32.totalorder %s278, %s281
      %p287 = scmp.eq.s32.totalorder %s22, 0
      %p288 = por %p286, %p287
      %p289 = scmp.ne.s32.totalorder %s278, %s281
      %p290 = scmp.eq.s32.totalorder %s27, 2
      %p291 = por %p289, %p290
      %p292 = scmp.ne.s32.totalorder %s281, %s282
      %p293 = scmp.eq.s32.totalorder %s27, 0
      %p294 = por %p292, %p293
      %p295 = scmp.ne.s32.totalorder %s281, %s282
      %p296 = scmp.eq.s32.totalorder %s28, 2
      %p297 = por %p295, %p296
      %p299 = scmp.ne.s32.totalorder %s282, %s298
      %p300 = scmp.eq.s32.totalorder %s28, 0
      %p301 = por %p299, %p300
      %s302 = ssub.s32 %s30, %s37
      %p303 = scmp.eq.s32.totalorder %s302, 0
      %s305 = sadd.s32 %s304, 1
      %s306 = scalar_select %p303, %s304, %s305
      %p309 = pneg %p303
      %p310 = scmp.eq.s32.totalorder %s22, 2
      %p311 = por %p309, %p310
      %p312 = scmp.ne.s32.totalorder %s304, %s307
      %p313 = scmp.eq.s32.totalorder %s22, 0
      %p314 = por %p312, %p313
      %p315 = scmp.ne.s32.totalorder %s304, %s307
      %p316 = scmp.eq.s32.totalorder %s27, 2
      %p317 = por %p315, %p316
      %p318 = scmp.ne.s32.totalorder %s307, %s308
      %p319 = scmp.eq.s32.totalorder %s27, 0
      %p320 = por %p318, %p319
      %p321 = scmp.ne.s32.totalorder %s307, %s308
      %p322 = scmp.eq.s32.totalorder %s28, 2
      %p323 = por %p321, %p322
      %p325 = scmp.ne.s32.totalorder %s308, %s324
      %p326 = scmp.eq.s32.totalorder %s28, 0
      %p327 = por %p325, %p326
      %s328 = ssub.s32 %s30, %s37
      %p329 = scmp.eq.s32.totalorder %s328, 0
      %s331 = sadd.s32 %s330, 1
      %s332 = scalar_select %p329, %s330, %s331
      %p335 = pneg %p329
      %p336 = scmp.eq.s32.totalorder %s22, 2
      %p337 = por %p335, %p336
      %p338 = scmp.ne.s32.totalorder %s330, %s333
      %p339 = scmp.eq.s32.totalorder %s22, 0
      %p340 = por %p338, %p339
      %p341 = scmp.ne.s32.totalorder %s330, %s333
      %p342 = scmp.eq.s32.totalorder %s27, 2
      %p343 = por %p341, %p342
      %p344 = scmp.ne.s32.totalorder %s333, %s334
      %p345 = scmp.eq.s32.totalorder %s27, 0
      %p346 = por %p344, %p345
      %p347 = scmp.ne.s32.totalorder %s333, %s334
      %p348 = scmp.eq.s32.totalorder %s28, 2
      %p349 = por %p347, %p348
      %p351 = scmp.ne.s32.totalorder %s334, %s350
      %p352 = scmp.eq.s32.totalorder %s28, 0
      %p353 = por %p351, %p352
      %s354 = ssub.s32 %s30, %s37
      %p355 = scmp.eq.s32.totalorder %s354, 0
      %s357 = sadd.s32 %s356, 1
      %s358 = scalar_select %p355, %s356, %s357
      %p361 = pneg %p355
      %p362 = scmp.eq.s32.totalorder %s22, 2
      %p363 = por %p361, %p362
      %p364 = scmp.ne.s32.totalorder %s356, %s359
      %p365 = scmp.eq.s32.totalorder %s22, 0
      %p366 = por %p364, %p365
      %p367 = scmp.ne.s32.totalorder %s356, %s359
      %p368 = scmp.eq.s32.totalorder %s27, 2
      %p369 = por %p367, %p368
      %p370 = scmp.ne.s32.totalorder %s359, %s360
      %p371 = scmp.eq.s32.totalorder %s27, 0
      %p372 = por %p370, %p371
      %p373 = scmp.ne.s32.totalorder %s359, %s360
      %p374 = scmp.eq.s32.totalorder %s28, 2
      %p375 = por %p373, %p374
      %p377 = scmp.ne.s32.totalorder %s360, %s376
      %p378 = scmp.eq.s32.totalorder %s28, 0
      %p379 = por %p377, %p378
      %s380 = ssub.s32 %s30, %s37
      %s381 = ssub.s32 %s29, %s41
      %s382 = sor.u32 %s380, %s381
      %p383 = scmp.eq.s32.totalorder %s382, 0
      %s385 = sadd.s32 %s384, 1
      %s386 = scalar_select %p383, %s384, %s385
      %p389 = pneg %p383
      %p390 = scmp.eq.s32.totalorder %s22, 2
      %p391 = por %p389, %p390
      %p392 = scmp.ne.s32.totalorder %s384, %s387
      %p393 = scmp.eq.s32.totalorder %s22, 0
      %p394 = por %p392, %p393
      %p395 = scmp.ne.s32.totalorder %s384, %s387
      %p396 = scmp.eq.s32.totalorder %s27, 2
      %p397 = por %p395, %p396
      %p398 = scmp.ne.s32.totalorder %s387, %s388
      %p399 = scmp.eq.s32.totalorder %s27, 0
      %p400 = por %p398, %p399
      %p401 = scmp.ne.s32.totalorder %s387, %s388
      %p402 = scmp.eq.s32.totalorder %s28, 2
      %p403 = por %p401, %p402
      %p405 = scmp.ne.s32.totalorder %s388, %s404
      %p406 = scmp.eq.s32.totalorder %s28, 0
      %p407 = por %p405, %p406
      %p408 = scmp.le.s32.totalorder 1, %s22
      %p409 = scmp.lt.s32.totalorder %s22, 4
      %p410 = pnand %p408, %p409
      %p411 = pneg %p410
      // Predicated region
      $region9: #{_ensemble_forward_impl.1} parent=5 // pred_check
        _
      $region10: #{_ensemble_forward_impl.1} parent=5 // pred_check_branch
        %413 = sbr.rel (%p410) target = $region12
      $region11: #{_ensemble_forward_impl.1} parent=5 // pred_region
        %s414 = ssub.s32 %s22, 1
        // Predicated region
        $region13: #{_ensemble_forward_impl.1} parent=11 // pred_check
          %p415 = pneg %p60
        $region14: #{_ensemble_forward_impl.1} parent=11 // pred_check_branch
          %417 = sbr.rel (%p415) target = $region16
        $region15: #{_ensemble_forward_impl.1} parent=11 // pred_region
          %p418 = scmp.lt.s32.totalorder %s31, 0
          %s419 = scalar_select %p418, %s31, 0
          %s420 = smul.addr %s419, 8
          %s421 = scalar_lea.vmem %s0, %s420
        $region16: #{_ensemble_forward_impl.1} parent=11 // pred_fallthru
          _
        // Predicated region
        $region17: #{_ensemble_forward_impl.1} parent=11 // pred_check
          %p422 = pneg %p86
        $region18: #{_ensemble_forward_impl.1} parent=11 // pred_check_branch
          %424 = sbr.rel (%p422) target = $region20
        $region19: #{_ensemble_forward_impl.1} parent=11 // pred_region
          %p425 = scmp.lt.s32.totalorder %s31, 0
          %s426 = scalar_select %p425, %s31, 0
          %s427 = smul.addr %s426, 8
          %s428 = scalar_lea.vmem %s1, %s427
        $region20: #{_ensemble_forward_impl.1} parent=11 // pred_fallthru
          _
      $region12: #{_ensemble_forward_impl.1} parent=5 // pred_fallthru
        _
      %p429 = scmp.lt.s32.totalorder %s22, 3
      // Predicated region
      $region21: #{_ensemble_forward_impl.1} parent=5 // pred_check
        %p430 = pneg %p429
      $region22: #{_ensemble_forward_impl.1} parent=5 // pred_check_branch
        %432 = sbr.rel (%p430) target = $region24
      $region23: #{_ensemble_forward_impl.1} parent=5 // pred_region
        // Predicated region
        $region25: #{_ensemble_forward_impl.1} parent=23 // pred_check
          %p433 = pneg %p106
        $region26: #{_ensemble_forward_impl.1} parent=23 // pred_check_branch
          %435 = sbr.rel (%p433) target = $region28
        $region27: #{_ensemble_forward_impl.1} parent=23 // pred_region
          %p436 = scmp.lt.s32.totalorder %s30, 2
          %s437 = scalar_select %p436, %s30, 2
          %s438 = smul.addr %s437, 4
          %s439 = smul.addr %s438, 8
          %s440 = scalar_lea.vmem %s2, %s439
        $region28: #{_ensemble_forward_impl.1} parent=23 // pred_fallthru
          _
        // Predicated region
        $region29: #{_ensemble_forward_impl.1} parent=23 // pred_check
          %p441 = pneg %p132
        $region30: #{_ensemble_forward_impl.1} parent=23 // pred_check_branch
          %443 = sbr.rel (%p441) target = $region32
        $region31: #{_ensemble_forward_impl.1} parent=23 // pred_region
          %p444 = scmp.lt.s32.totalorder %s30, 2
          %s445 = scalar_select %p444, %s30, 2
          %s446 = smul.addr %s445, 2
          %s447 = smul.addr %s446, 8
          %s448 = scalar_lea.vmem %s3, %s447
        $region32: #{_ensemble_forward_impl.1} parent=23 // pred_fallthru
          _
        // Predicated region
        $region33: #{_ensemble_forward_impl.1} parent=23 // pred_check
          %p449 = pneg %p158
        $region34: #{_ensemble_forward_impl.1} parent=23 // pred_check_branch
          %451 = sbr.rel (%p449) target = $region36
        $region35: #{_ensemble_forward_impl.1} parent=23 // pred_region
          %p452 = scmp.lt.s32.totalorder %s30, 2
          %s453 = scalar_select %p452, %s30, 2
          %s454 = smul.addr %s453, 2
          %s455 = scalar_lea.vmem %s4, %s454
        $region36: #{_ensemble_forward_impl.1} parent=23 // pred_fallthru
          _
        // Predicated region
        $region37: #{_ensemble_forward_impl.1} parent=23 // pred_check
          %p456 = pneg %p184
        $region38: #{_ensemble_forward_impl.1} parent=23 // pred_check_branch
          %458 = sbr.rel (%p456) target = $region40
        $region39: #{_ensemble_forward_impl.1} parent=23 // pred_region
          %p459 = scmp.lt.s32.totalorder %s30, 2
          %s460 = scalar_select %p459, %s30, 2
          %s461 = smul.addr %s460, 2
          %s462 = scalar_lea.vmem %s5, %s461
        $region40: #{_ensemble_forward_impl.1} parent=23 // pred_fallthru
          _
        // Predicated region
        $region41: #{_ensemble_forward_impl.1} parent=23 // pred_check
          %p463 = pneg %p210
        $region42: #{_ensemble_forward_impl.1} parent=23 // pred_check_branch
          %465 = sbr.rel (%p463) target = $region44
        $region43: #{_ensemble_forward_impl.1} parent=23 // pred_region
          %p466 = scmp.lt.s32.totalorder %s30, 2
          %s467 = scalar_select %p466, %s30, 2
          %s468 = smul.addr %s467, 2
          %s469 = scalar_lea.vmem %s6, %s468
        $region44: #{_ensemble_forward_impl.1} parent=23 // pred_fallthru
          _
        // Predicated region
        $region45: #{_ensemble_forward_impl.1} parent=23 // pred_check
          %p470 = pneg %p236
        $region46: #{_ensemble_forward_impl.1} parent=23 // pred_check_branch
          %472 = sbr.rel (%p470) target = $region48
        $region47: #{_ensemble_forward_impl.1} parent=23 // pred_region
          %s473 = sand.u32 %s226, 1
          %s474 = scalar_lea.sflag [#allocation3], %s473
          %s475 = sand.u32 %s226, 1
          %s476 = smul.addr %s475, 512
          %s477 = scalar_lea.vmem [#allocation2], %s476
          %479 = vsyncadd %s474, 0
          %s480 = smul.addr %s30, 64
          %s481 = smul.addr %s480, 8
          %s482 = scalar_lea.hbm %s7, %s481
          %s483 = sshll.u32 %s482, 4
          %s484 = int_to_ptr.hbm [resolvable:$true] %s483
          %s485 = sshll.u32 %s477, 4
          %s486 = int_to_ptr.vmem [resolvable:$true] %s485
          %491 = dma.hbm_to_vmem [thread:$0]  %s484, 8192, %s486, %s474, 256, 256, 16
        $region48: #{_ensemble_forward_impl.1} parent=23 // pred_fallthru
          _
        // Predicated region
        $region49: #{_ensemble_forward_impl.1} parent=23 // pred_check
          %p492 = pneg %p262
        $region50: #{_ensemble_forward_impl.1} parent=23 // pred_check_branch
          %494 = sbr.rel (%p492) target = $region52
        $region51: #{_ensemble_forward_impl.1} parent=23 // pred_region
          %p495 = scmp.lt.s32.totalorder %s30, 2
          %s496 = scalar_select %p495, %s30, 2
          %s497 = smul.addr %s496, 2
          %s498 = scalar_lea.vmem %s8, %s497
        $region52: #{_ensemble_forward_impl.1} parent=23 // pred_fallthru
          _
        // Predicated region
        $region53: #{_ensemble_forward_impl.1} parent=23 // pred_check
          %p499 = pneg %p288
        $region54: #{_ensemble_forward_impl.1} parent=23 // pred_check_branch
          %501 = sbr.rel (%p499) target = $region56
        $region55: #{_ensemble_forward_impl.1} parent=23 // pred_region
          %p502 = scmp.lt.s32.totalorder %s30, 2
          %s503 = scalar_select %p502, %s30, 2
          %s504 = smul.addr %s503, 2
          %s505 = scalar_lea.vmem %s9, %s504
        $region56: #{_ensemble_forward_impl.1} parent=23 // pred_fallthru
          _
        // Predicated region
        $region57: #{_ensemble_forward_impl.1} parent=23 // pred_check
          %p506 = pneg %p314
        $region58: #{_ensemble_forward_impl.1} parent=23 // pred_check_branch
          %508 = sbr.rel (%p506) target = $region60
        $region59: #{_ensemble_forward_impl.1} parent=23 // pred_region
          %p509 = scmp.lt.s32.totalorder %s30, 2
          %s510 = scalar_select %p509, %s30, 2
          %s511 = smul.addr %s510, 2
          %s512 = scalar_lea.vmem %s10, %s511
        $region60: #{_ensemble_forward_impl.1} parent=23 // pred_fallthru
          _
        // Predicated region
        $region61: #{_ensemble_forward_impl.1} parent=23 // pred_check
          %p513 = pneg %p340
        $region62: #{_ensemble_forward_impl.1} parent=23 // pred_check_branch
          %515 = sbr.rel (%p513) target = $region64
        $region63: #{_ensemble_forward_impl.1} parent=23 // pred_region
          %p516 = scmp.lt.s32.totalorder %s30, 2
          %s517 = scalar_select %p516, %s30, 2
          %s518 = smul.addr %s517, 32
          %s519 = smul.addr %s518, 8
          %s520 = scalar_lea.vmem %s11, %s519
        $region64: #{_ensemble_forward_impl.1} parent=23 // pred_fallthru
          _
        // Predicated region
        $region65: #{_ensemble_forward_impl.1} parent=23 // pred_check
          %p521 = pneg %p366
        $region66: #{_ensemble_forward_impl.1} parent=23 // pred_check_branch
          %523 = sbr.rel (%p521) target = $region68
        $region67: #{_ensemble_forward_impl.1} parent=23 // pred_region
          %p524 = scmp.lt.s32.totalorder %s30, 2
          %s525 = scalar_select %p524, %s30, 2
          %s526 = scalar_lea.vmem %s12, %s525
        $region68: #{_ensemble_forward_impl.1} parent=23 // pred_fallthru
          _
      $region24: #{_ensemble_forward_impl.1} parent=5 // pred_fallthru
        _
      %p527 = scmp.le.s32.totalorder 1, %s22
      %p528 = scmp.lt.s32.totalorder %s22, 4
      %p529 = pnand %p527, %p528
      %p530 = pneg %p529
      // Predicated region
      $region69: #{_ensemble_forward_impl.1} parent=5 // pred_check
        _
      $region70: #{_ensemble_forward_impl.1} parent=5 // pred_check_branch
        %532 = sbr.rel (%p529) target = $region72
      $region71: #{_ensemble_forward_impl.1} parent=5 // pred_region
        %s533 = ssub.s32 %s22, 1
        %s534 = sand.u32 %s229, 1
        %s535 = scalar_lea.sflag [#allocation3], %s534
        %s536 = sand.u32 %s229, 1
        %s537 = smul.addr %s536, 512
        %s538 = scalar_lea.vmem [#allocation2], %s537
        // Predicated region
        $region73: #{_ensemble_forward_impl.1} parent=71 // pred_check
          %p539 = pneg %p242
        $region74: #{_ensemble_forward_impl.1} parent=71 // pred_check_branch
          %541 = sbr.rel (%p539) target = $region76
        $region75: #{_ensemble_forward_impl.1} parent=71 // pred_region
          %543 = dma.done %s535, 8192
        $region76: #{_ensemble_forward_impl.1} parent=71 // pred_fallthru
          _
        %p544 = scmp.lt.s32.totalorder %s31, 0
        %s545 = scalar_select %p544, %s31, 0
        %s546 = smul.addr %s545, 8
        %s547 = scalar_lea.vmem %s0, %s546
        %p548 = pneg %p60
        %p549 = pneg %p57
        %p550 = scmp.lt.s32.totalorder %s31, 0
        %s551 = scalar_select %p550, %s31, 0
        %s552 = smul.addr %s551, 8
        %s553 = scalar_lea.vmem %s1, %s552
        %p554 = pneg %p86
        %p555 = pneg %p83
        %p556 = scmp.lt.s32.totalorder %s32, 2
        %s557 = scalar_select %p556, %s32, 2
        %s558 = smul.addr %s557, 4
        %s559 = smul.addr %s558, 8
        %s560 = scalar_lea.vmem %s2, %s559
        %p561 = pneg %p112
        %p562 = pneg %p109
        %p563 = scmp.lt.s32.totalorder %s32, 2
        %s564 = scalar_select %p563, %s32, 2
        %s565 = smul.addr %s564, 2
        %s566 = smul.addr %s565, 8
        %s567 = scalar_lea.vmem %s3, %s566
        %p568 = pneg %p138
        %p569 = pneg %p135
        %p570 = scmp.lt.s32.totalorder %s32, 2
        %s571 = scalar_select %p570, %s32, 2
        %s572 = smul.addr %s571, 2
        %s573 = scalar_lea.vmem %s4, %s572
        %p574 = pneg %p164
        %p575 = pneg %p161
        %p576 = scmp.lt.s32.totalorder %s32, 2
        %s577 = scalar_select %p576, %s32, 2
        %s578 = smul.addr %s577, 2
        %s579 = scalar_lea.vmem %s5, %s578
        %p580 = pneg %p190
        %p581 = pneg %p187
        %p582 = scmp.lt.s32.totalorder %s32, 2
        %s583 = scalar_select %p582, %s32, 2
        %s584 = smul.addr %s583, 2
        %s585 = scalar_lea.vmem %s6, %s584
        %p586 = pneg %p216
        %p587 = pneg %p213
        %s588 = sand.u32 %s229, 1
        %s589 = scalar_lea.sflag [#allocation3], %s588
        %s590 = sand.u32 %s229, 1
        %s591 = smul.addr %s590, 512
        %s592 = scalar_lea.vmem [#allocation2], %s591
        %p593 = pneg %p242
        %p594 = pneg %p239
        %p595 = scmp.lt.s32.totalorder %s32, 2
        %s596 = scalar_select %p595, %s32, 2
        %s597 = smul.addr %s596, 2
        %s598 = scalar_lea.vmem %s8, %s597
        %p599 = pneg %p268
        %p600 = pneg %p265
        %p601 = scmp.lt.s32.totalorder %s32, 2
        %s602 = scalar_select %p601, %s32, 2
        %s603 = smul.addr %s602, 2
        %s604 = scalar_lea.vmem %s9, %s603
        %p605 = pneg %p294
        %p606 = pneg %p291
        %p607 = scmp.lt.s32.totalorder %s32, 2
        %s608 = scalar_select %p607, %s32, 2
        %s609 = smul.addr %s608, 2
        %s610 = scalar_lea.vmem %s10, %s609
        %p611 = pneg %p320
        %p612 = pneg %p317
        %p613 = scmp.lt.s32.totalorder %s32, 2
        %s614 = scalar_select %p613, %s32, 2
        %s615 = smul.addr %s614, 32
        %s616 = smul.addr %s615, 8
        %s617 = scalar_lea.vmem %s11, %s616
        %p618 = pneg %p346
        %p619 = pneg %p343
        %p620 = scmp.lt.s32.totalorder %s32, 2
        %s621 = scalar_select %p620, %s32, 2
        %s622 = scalar_lea.vmem %s12, %s621
        %p623 = pneg %p372
        %p624 = pneg %p369
        %p625 = pneg %p400
        %p626 = pneg %p397
        %p627 = scmp.lt.s32.totalorder %s32, 2
        %s628 = scalar_select %p627, %s32, 2
        %p629 = scmp.lt.s32.totalorder %s31, 0
        %s630 = scalar_select %p629, %s31, 0
        %s631 = sadd.s32 %s630, %s628
        %s632 = smul.addr %s631, 8
        %s633 = scalar_lea.vmem %s13, %s632
        %p634 = scmp.lt.s32.totalorder %s31, 0
        %s635 = scalar_select %p634, %s31, 0
        %s636 = smul.addr %s635, 8
        %s637 = scalar_lea.vmem %s0, %s636
        %p638 = scmp.lt.s32.totalorder %s31, 0
        %s639 = scalar_select %p638, %s31, 0
        %s640 = smul.addr %s639, 8
        %s641 = scalar_lea.vmem %s1, %s640
        %p642 = scmp.lt.s32.totalorder %s32, 2
        %s643 = scalar_select %p642, %s32, 2
        %s644 = smul.addr %s643, 4
        %s645 = smul.addr %s644, 8
        %s646 = scalar_lea.vmem %s2, %s645
        %p647 = scmp.lt.s32.totalorder %s32, 2
        %s648 = scalar_select %p647, %s32, 2
        %s649 = smul.addr %s648, 2
        %s650 = smul.addr %s649, 8
        %s651 = scalar_lea.vmem %s3, %s650
        %p652 = scmp.lt.s32.totalorder %s32, 2
        %s653 = scalar_select %p652, %s32, 2
        %s654 = smul.addr %s653, 2
        %s655 = scalar_lea.vmem %s4, %s654
        %p656 = scmp.lt.s32.totalorder %s32, 2
        %s657 = scalar_select %p656, %s32, 2
        %s658 = smul.addr %s657, 2
        %s659 = scalar_lea.vmem %s5, %s658
        %p660 = scmp.lt.s32.totalorder %s32, 2
        %s661 = scalar_select %p660, %s32, 2
        %s662 = smul.addr %s661, 2
        %s663 = scalar_lea.vmem %s6, %s662
        %p664 = scmp.lt.s32.totalorder %s32, 2
        %s665 = scalar_select %p664, %s32, 2
        %s666 = smul.addr %s665, 2
        %s667 = scalar_lea.vmem %s8, %s666
        %p668 = scmp.lt.s32.totalorder %s32, 2
        %s669 = scalar_select %p668, %s32, 2
        %s670 = smul.addr %s669, 2
        %s671 = scalar_lea.vmem %s9, %s670
        %p672 = scmp.lt.s32.totalorder %s32, 2
        %s673 = scalar_select %p672, %s32, 2
        %s674 = smul.addr %s673, 2
        %s675 = scalar_lea.vmem %s10, %s674
        %p676 = scmp.lt.s32.totalorder %s32, 2
        %s677 = scalar_select %p676, %s32, 2
        %s678 = smul.addr %s677, 32
        %s679 = smul.addr %s678, 8
        %s680 = scalar_lea.vmem %s11, %s679
        %p681 = scmp.lt.s32.totalorder %s32, 2
        %s682 = scalar_select %p681, %s32, 2
        %s683 = scalar_lea.vmem %s12, %s682
        %p684 = scmp.lt.s32.totalorder %s32, 2
        %s685 = scalar_select %p684, %s32, 2
        %p686 = scmp.lt.s32.totalorder %s31, 0
        %s687 = scalar_select %p686, %s31, 0
        %s688 = sadd.s32 %s687, %s685
        %s689 = smul.addr %s688, 8
        %s690 = scalar_lea.vmem %s13, %s689
        %v691 = vld [vmem:[%s637] sm:$0xff]
        %v692 = vld [vmem:[%s641] sm:$0xff]
        %v693 = vld [vmem:[%s646] sm:$0xff]
        %v694 = vld [vmem:[%s646 + $0x8] sm:$0xff]
        %v695 = vld [vmem:[%s646 + $0x10] sm:$0xff]
        %v696 = vld [vmem:[%s646 + $0x18] sm:$0xff]
        %v697 = vld [vmem:[%s651] sm:$0xff]
        %v698 = vld [vmem:[%s651 + $0x8] sm:$0xff]
        %vm699 = vcmask 64512
        %v701 = vsel %vm699, %v692, 0
        %703 = vmatpush.msra.mxu0 0.0
        %704 = vmatpush.msra.mxu0 0.0
        %705 = vmatpush.msra.mxu0 0.0
        %706 = vmatpush.msra.mxu0 0.0
        %707 = vmatpush.msra.mxu0 0.0
        %708 = vmatpush.msra.mxu0 0.0
        %709 = vmatpush.msra.mxu0 0.0
        %710 = vmatpush.msra.mxu0 0.0
        %711 = vmatpush.msra.mxu0 0.0
        %712 = vmatpush.msra.mxu0 0.0
        %713 = vmatpush.msra.mxu0 0.0
        %714 = vmatpush.msra.mxu0 0.0
        %715 = vmatpush.msra.mxu0 0.0
        %716 = vmatpush.msra.mxu0 0.0
        %717 = vmatpush.msra.mxu0 0.0
        %718 = vmatpush.msra.mxu0 %v697
        %719 = vmatmul.f32.gmra.mxu0 %v701
        %v720 = vpop.f32.mrf.mxu0
        %v721 = vadd.f32 0.0, %v720
        %722 = vdwg.mxu0
        %723 = vmatpush.msra.mxu0 0.0
        %724 = vmatpush.msra.mxu0 0.0
        %725 = vmatpush.msra.mxu0 0.0
        %726 = vmatpush.msra.mxu0 0.0
        %727 = vmatpush.msra.mxu0 0.0
        %728 = vmatpush.msra.mxu0 0.0
        %729 = vmatpush.msra.mxu0 0.0
        %730 = vmatpush.msra.mxu0 0.0
        %731 = vmatpush.msra.mxu0 0.0
        %732 = vmatpush.msra.mxu0 0.0
        %733 = vmatpush.msra.mxu0 0.0
        %734 = vmatpush.msra.mxu0 0.0
        %735 = vmatpush.msra.mxu0 0.0
        %736 = vmatpush.msra.mxu0 0.0
        %737 = vmatpush.msra.mxu0 0.0
        %738 = vmatpush.msra.mxu0 %v698
        %739 = vmatmul.f32.gmra.mxu0 %v701
        %v740 = vpop.f32.mrf.mxu0
        %v741 = vadd.f32 0.0, %v740
        %742 = vdwg.mxu0
        %vm743 = vcmask 130048
        %v745 = vsel %vm743, %v691, 0
        %747 = vmatpush.msra.mxu0 0.0
        %748 = vmatpush.msra.mxu0 0.0
        %749 = vmatpush.msra.mxu0 0.0
        %750 = vmatpush.msra.mxu0 0.0
        %751 = vmatpush.msra.mxu0 0.0
        %752 = vmatpush.msra.mxu0 0.0
        %753 = vmatpush.msra.mxu0 0.0
        %754 = vmatpush.msra.mxu0 0.0
        %755 = vmatpush.msra.mxu0 0.0
        %756 = vmatpush.msra.mxu0 0.0
        %757 = vmatpush.msra.mxu0 0.0
        %758 = vmatpush.msra.mxu0 0.0
        %759 = vmatpush.msra.mxu0 0.0
        %760 = vmatpush.msra.mxu0 0.0
        %761 = vmatpush.msra.mxu0 %v695
        %762 = vmatpush.msra.mxu0 %v693
        %763 = vmatmul.f32.gmra.mxu0 %v745
        %v764 = vpop.f32.mrf.mxu0
        %v765 = vadd.f32 %v721, %v764
        %766 = vdwg.mxu0
        %767 = vmatpush.msra.mxu0 0.0
        %768 = vmatpush.msra.mxu0 0.0
        %769 = vmatpush.msra.mxu0 0.0
        %770 = vmatpush.msra.mxu0 0.0
        %771 = vmatpush.msra.mxu0 0.0
        %772 = vmatpush.msra.mxu0 0.0
        %773 = vmatpush.msra.mxu0 0.0
        %774 = vmatpush.msra.mxu0 0.0
        %775 = vmatpush.msra.mxu0 0.0
        %776 = vmatpush.msra.mxu0 0.0
        %777 = vmatpush.msra.mxu0 0.0
        %778 = vmatpush.msra.mxu0 0.0
        %779 = vmatpush.msra.mxu0 0.0
        %780 = vmatpush.msra.mxu0 0.0
        %781 = vmatpush.msra.mxu0 %v696
        %782 = vmatpush.msra.mxu0 %v694
        %783 = vmatmul.f32.gmra.mxu0 %v745
        %v784 = vpop.f32.mrf.mxu0
        %v785 = vadd.f32 %v741, %v784
        %786 = vdwg.mxu0
        %v787 = vld [vmem:[%s655] sm:$0x3]
        %v789 = vperm.slane %v787, 0
        %v790 = vperm.slane %v787, 1
        %v793 = vadd.f32 %v765, %v789
        %v794 = vadd.f32 %v785, %v790
        %v795 = vmax.f32 %v793, 0.0
        %v796 = vmax.f32 %v794, 0.0
        %v797 = vld [vmem:[%s659] sm:$0x3]
        %v798 = vld [vmem:[%s663] sm:$0x3]
        %v799 = vadd.f32 %v795, %v796
        %800 = vadd.xlane.f32.xlu0 %v799
        %v801 = vpop.xlane.xlu0 %800
        %v802 = vrcp.pop 256.0
        %v803 = vmul.f32 256.0, %v802
        %v804 = vsub.f32 1.0, %v803
        %v805 = vmul.f32 %v802, %v804
        %v806 = vadd.f32 %v802, %v805
        %vm807 = vweird.f32 %v802
        %v808 = vsel %vm807, %v802, %v806
        %v809 = vmul.f32 %v801, %v808
        %v810 = vmul.f32 %v795, %v795
        %v811 = vmul.f32 %v796, %v796
        %v812 = vadd.f32 %v810, %v811
        %813 = vadd.xlane.f32.xlu0 %v812
        %v814 = vpop.xlane.xlu0 %813
        %v815 = vmul.f32 %v814, %v808
        %v816 = vmul.f32 %v809, %v809
        %v817 = vsub.f32 %v815, %v816
        %v818 = vadd.f32 %v817, 1e-05
        %v819 = vrsqrt.pop %v818
        %v820 = vmul.f32 %v819, %v818
        %v821 = vmul.f32 %v820, %v819
        %v822 = vmul.f32 0.5, %v821
        %v823 = vsub.f32 1.5, %v822
        %v824 = vmul.f32 %v819, %v823
        %vm825 = vweird.f32 %v818
        %vm826 = vweird.f32 %v819
        %vm827 = vmor %vm825, %vm826
        %v828 = vsel %vm827, %v819, %v824
        %v829 = vsub.f32 %v795, %v809
        %v830 = vsub.f32 %v796, %v809
        %v832 = vperm.slane %v797, 0
        %v833 = vperm.slane %v797, 1
        %v836 = vmul.f32 %v828, %v832
        %v837 = vmul.f32 %v828, %v833
        %v838 = vmul.f32 %v829, %v836
        %v839 = vmul.f32 %v830, %v837
        %v841 = vperm.slane %v798, 0
        %v842 = vperm.slane %v798, 1
        %v845 = vadd.f32 %v838, %v841
        %v846 = vadd.f32 %v839, %v842
        %v847 = vld [vmem:[%s538] sm:$0xff]
        %v848 = vld [vmem:[%s538 + $0x8] sm:$0xff]
        %v849 = vld [vmem:[%s538 + $0x10] sm:$0xff]
        %v850 = vld [vmem:[%s538 + $0x18] sm:$0xff]
        %v851 = vld [vmem:[%s538 + $0x20] sm:$0xff]
        %v852 = vld [vmem:[%s538 + $0x28] sm:$0xff]
        %v853 = vld [vmem:[%s538 + $0x30] sm:$0xff]
        %v854 = vld [vmem:[%s538 + $0x38] sm:$0xff]
        %v855 = vld [vmem:[%s538 + $0x40] sm:$0xff]
        %v856 = vld [vmem:[%s538 + $0x48] sm:$0xff]
        %v857 = vld [vmem:[%s538 + $0x50] sm:$0xff]
        %v858 = vld [vmem:[%s538 + $0x58] sm:$0xff]
        %v859 = vld [vmem:[%s538 + $0x60] sm:$0xff]
        %v860 = vld [vmem:[%s538 + $0x68] sm:$0xff]
        %v861 = vld [vmem:[%s538 + $0x70] sm:$0xff]
        %v862 = vld [vmem:[%s538 + $0x78] sm:$0xff]
        %v863 = vld [vmem:[%s538 + $0x80] sm:$0xff]
        %v864 = vld [vmem:[%s538 + $0x88] sm:$0xff]
        %v865 = vld [vmem:[%s538 + $0x90] sm:$0xff]
        %v866 = vld [vmem:[%s538 + $0x98] sm:$0xff]
        %v867 = vld [vmem:[%s538 + $0xa0] sm:$0xff]
        %v868 = vld [vmem:[%s538 + $0xa8] sm:$0xff]
        %v869 = vld [vmem:[%s538 + $0xb0] sm:$0xff]
        %v870 = vld [vmem:[%s538 + $0xb8] sm:$0xff]
        %v871 = vld [vmem:[%s538 + $0xc0] sm:$0xff]
        %v872 = vld [vmem:[%s538 + $0xc8] sm:$0xff]
        %v873 = vld [vmem:[%s538 + $0xd0] sm:$0xff]
        %v874 = vld [vmem:[%s538 + $0xd8] sm:$0xff]
        %v875 = vld [vmem:[%s538 + $0xe0] sm:$0xff]
        %v876 = vld [vmem:[%s538 + $0xe8] sm:$0xff]
        %v877 = vld [vmem:[%s538 + $0xf0] sm:$0xff]
        %v878 = vld [vmem:[%s538 + $0xf8] sm:$0xff]
        %v879 = vld [vmem:[%s538 + $0x100] sm:$0xff]
        %v880 = vld [vmem:[%s538 + $0x108] sm:$0xff]
        %v881 = vld [vmem:[%s538 + $0x110] sm:$0xff]
        %v882 = vld [vmem:[%s538 + $0x118] sm:$0xff]
        %v883 = vld [vmem:[%s538 + $0x120] sm:$0xff]
        %v884 = vld [vmem:[%s538 + $0x128] sm:$0xff]
        %v885 = vld [vmem:[%s538 + $0x130] sm:$0xff]
        %v886 = vld [vmem:[%s538 + $0x138] sm:$0xff]
        %v887 = vld [vmem:[%s538 + $0x140] sm:$0xff]
        %v888 = vld [vmem:[%s538 + $0x148] sm:$0xff]
        %v889 = vld [vmem:[%s538 + $0x150] sm:$0xff]
        %v890 = vld [vmem:[%s538 + $0x158] sm:$0xff]
        %v891 = vld [vmem:[%s538 + $0x160] sm:$0xff]
        %v892 = vld [vmem:[%s538 + $0x168] sm:$0xff]
        %v893 = vld [vmem:[%s538 + $0x170] sm:$0xff]
        %v894 = vld [vmem:[%s538 + $0x178] sm:$0xff]
        %v895 = vld [vmem:[%s538 + $0x180] sm:$0xff]
        %v896 = vld [vmem:[%s538 + $0x188] sm:$0xff]
        %v897 = vld [vmem:[%s538 + $0x190] sm:$0xff]
        %v898 = vld [vmem:[%s538 + $0x198] sm:$0xff]
        %v899 = vld [vmem:[%s538 + $0x1a0] sm:$0xff]
        %v900 = vld [vmem:[%s538 + $0x1a8] sm:$0xff]
        %v901 = vld [vmem:[%s538 + $0x1b0] sm:$0xff]
        %v902 = vld [vmem:[%s538 + $0x1b8] sm:$0xff]
        %v903 = vld [vmem:[%s538 + $0x1c0] sm:$0xff]
        %v904 = vld [vmem:[%s538 + $0x1c8] sm:$0xff]
        %v905 = vld [vmem:[%s538 + $0x1d0] sm:$0xff]
        %v906 = vld [vmem:[%s538 + $0x1d8] sm:$0xff]
        %v907 = vld [vmem:[%s538 + $0x1e0] sm:$0xff]
        %v908 = vld [vmem:[%s538 + $0x1e8] sm:$0xff]
        %v909 = vld [vmem:[%s538 + $0x1f0] sm:$0xff]
        %v910 = vld [vmem:[%s538 + $0x1f8] sm:$0xff]
        %v911 = vld [vmem:[%s667] sm:$0x3]
        %v913 = vperm.slane %v911, 0
        %v914 = vperm.slane %v911, 1
        %917 = vmatpush.msra.mxu0 %v877
        %918 = vmatpush.msra.mxu0 %v875
        %919 = vmatpush.msra.mxu0 %v873
        %920 = vmatpush.msra.mxu0 %v871
        %921 = vmatpush.msra.mxu0 %v869
        %922 = vmatpush.msra.mxu0 %v867
        %923 = vmatpush.msra.mxu0 %v865
        %924 = vmatpush.msra.mxu0 %v863
        %925 = vmatpush.msra.mxu0 %v861
        %926 = vmatpush.msra.mxu0 %v859
        %927 = vmatpush.msra.mxu0 %v857
        %928 = vmatpush.msra.mxu0 %v855
        %929 = vmatpush.msra.mxu0 %v853
        %930 = vmatpush.msra.mxu0 %v851
        %931 = vmatpush.msra.mxu0 %v849
        %932 = vmatpush.msra.mxu0 %v847
        %933 = vmatmul.f32.gmra.mxu0 %v845
        %v934 = vpop.f32.mrf.mxu0
        %v935 = vadd.f32 %v913, %v934
        %936 = vdwg.mxu0
        %937 = vmatpush.msra.mxu0 %v909
        %938 = vmatpush.msra.mxu0 %v907
        %939 = vmatpush.msra.mxu0 %v905
        %940 = vmatpush.msra.mxu0 %v903
        %941 = vmatpush.msra.mxu0 %v901
        %942 = vmatpush.msra.mxu0 %v899
        %943 = vmatpush.msra.mxu0 %v897
        %944 = vmatpush.msra.mxu0 %v895
        %945 = vmatpush.msra.mxu0 %v893
        %946 = vmatpush.msra.mxu0 %v891
        %947 = vmatpush.msra.mxu0 %v889
        %948 = vmatpush.msra.mxu0 %v887
        %949 = vmatpush.msra.mxu0 %v885
        %950 = vmatpush.msra.mxu0 %v883
        %951 = vmatpush.msra.mxu0 %v881
        %952 = vmatpush.msra.mxu0 %v879
        %953 = vmatmul.f32.gmra.mxu0 %v846
        %v954 = vpop.f32.mrf.mxu0
        %v955 = vadd.f32 %v935, %v954
        %956 = vdwg.mxu0
        %957 = vmatpush.msra.mxu0 %v878
        %958 = vmatpush.msra.mxu0 %v876
        %959 = vmatpush.msra.mxu0 %v874
        %960 = vmatpush.msra.mxu0 %v872
        %961 = vmatpush.msra.mxu0 %v870
        %962 = vmatpush.msra.mxu0 %v868
        %963 = vmatpush.msra.mxu0 %v866
        %964 = vmatpush.msra.mxu0 %v864
        %965 = vmatpush.msra.mxu0 %v862
        %966 = vmatpush.msra.mxu0 %v860
        %967 = vmatpush.msra.mxu0 %v858
        %968 = vmatpush.msra.mxu0 %v856
        %969 = vmatpush.msra.mxu0 %v854
        %970 = vmatpush.msra.mxu0 %v852
        %971 = vmatpush.msra.mxu0 %v850
        %972 = vmatpush.msra.mxu0 %v848
        %973 = vmatmul.f32.gmra.mxu0 %v845
        %v974 = vpop.f32.mrf.mxu0
        %v975 = vadd.f32 %v914, %v974
        %976 = vdwg.mxu0
        %977 = vmatpush.msra.mxu0 %v910
        %978 = vmatpush.msra.mxu0 %v908
        %979 = vmatpush.msra.mxu0 %v906
        %980 = vmatpush.msra.mxu0 %v904
        %981 = vmatpush.msra.mxu0 %v902
        %982 = vmatpush.msra.mxu0 %v900
        %983 = vmatpush.msra.mxu0 %v898
        %984 = vmatpush.msra.mxu0 %v896
        %985 = vmatpush.msra.mxu0 %v894
        %986 = vmatpush.msra.mxu0 %v892
        %987 = vmatpush.msra.mxu0 %v890
        %988 = vmatpush.msra.mxu0 %v888
        %989 = vmatpush.msra.mxu0 %v886
        %990 = vmatpush.msra.mxu0 %v884
        %991 = vmatpush.msra.mxu0 %v882
        %992 = vmatpush.msra.mxu0 %v880
        %993 = vmatmul.f32.gmra.mxu0 %v846
        %v994 = vpop.f32.mrf.mxu0
        %v995 = vadd.f32 %v975, %v994
        %996 = vdwg.mxu0
        %v997 = vmax.f32 %v955, 0.0
        %v998 = vmax.f32 %v995, 0.0
        %v999 = vld [vmem:[%s671] sm:$0x3]
        %v1000 = vld [vmem:[%s675] sm:$0x3]
        %v1001 = vadd.f32 %v997, %v998
        %1002 = vadd.xlane.f32.xlu0 %v1001
        %v1003 = vpop.xlane.xlu0 %1002
        %v1004 = vmul.f32 %v1003, %v808
        %v1005 = vmul.f32 %v997, %v997
        %v1006 = vmul.f32 %v998, %v998
        %v1007 = vadd.f32 %v1005, %v1006
        %1008 = vadd.xlane.f32.xlu0 %v1007
        %v1009 = vpop.xlane.xlu0 %1008
        %v1010 = vmul.f32 %v1009, %v808
        %v1011 = vmul.f32 %v1004, %v1004
        %v1012 = vsub.f32 %v1010, %v1011
        %v1013 = vadd.f32 %v1012, 1e-05
        %v1014 = vrsqrt.pop %v1013
        %v1015 = vmul.f32 %v1014, %v1013
        %v1016 = vmul.f32 %v1015, %v1014
        %v1017 = vmul.f32 0.5, %v1016
        %v1018 = vsub.f32 1.5, %v1017
        %v1019 = vmul.f32 %v1014, %v1018
        %vm1020 = vweird.f32 %v1013
        %vm1021 = vweird.f32 %v1014
        %vm1022 = vmor %vm1020, %vm1021
        %v1023 = vsel %vm1022, %v1014, %v1019
        %v1024 = vsub.f32 %v997, %v1004
        %v1025 = vsub.f32 %v998, %v1004
        %v1027 = vperm.slane %v999, 0
        %v1028 = vperm.slane %v999, 1
        %v1031 = vmul.f32 %v1023, %v1027
        %v1032 = vmul.f32 %v1023, %v1028
        %v1033 = vmul.f32 %v1024, %v1031
        %v1034 = vmul.f32 %v1025, %v1032
        %v1036 = vperm.slane %v1000, 0
        %v1037 = vperm.slane %v1000, 1
        %v1040 = vadd.f32 %v1033, %v1036
        %v1041 = vadd.f32 %v1034, %v1037
        %v1042 = vld [vmem:[%s680] sm:$0xff]
        %v1043 = vld [vmem:[%s680 + $0x8] sm:$0xff]
        %v1044 = vld [vmem:[%s680 + $0x10] sm:$0xff]
        %v1045 = vld [vmem:[%s680 + $0x18] sm:$0xff]
        %v1046 = vld [vmem:[%s680 + $0x20] sm:$0xff]
        %v1047 = vld [vmem:[%s680 + $0x28] sm:$0xff]
        %v1048 = vld [vmem:[%s680 + $0x30] sm:$0xff]
        %v1049 = vld [vmem:[%s680 + $0x38] sm:$0xff]
        %v1050 = vld [vmem:[%s680 + $0x40] sm:$0xff]
        %v1051 = vld [vmem:[%s680 + $0x48] sm:$0xff]
        %v1052 = vld [vmem:[%s680 + $0x50] sm:$0xff]
        %v1053 = vld [vmem:[%s680 + $0x58] sm:$0xff]
        %v1054 = vld [vmem:[%s680 + $0x60] sm:$0xff]
        %v1055 = vld [vmem:[%s680 + $0x68] sm:$0xff]
        %v1056 = vld [vmem:[%s680 + $0x70] sm:$0xff]
        %v1057 = vld [vmem:[%s680 + $0x78] sm:$0xff]
        %v1058 = vld [vmem:[%s680 + $0x80] sm:$0xff]
        %v1059 = vld [vmem:[%s680 + $0x88] sm:$0xff]
        %v1060 = vld [vmem:[%s680 + $0x90] sm:$0xff]
        %v1061 = vld [vmem:[%s680 + $0x98] sm:$0xff]
        %v1062 = vld [vmem:[%s680 + $0xa0] sm:$0xff]
        %v1063 = vld [vmem:[%s680 + $0xa8] sm:$0xff]
        %v1064 = vld [vmem:[%s680 + $0xb0] sm:$0xff]
        %v1065 = vld [vmem:[%s680 + $0xb8] sm:$0xff]
        %v1066 = vld [vmem:[%s680 + $0xc0] sm:$0xff]
        %v1067 = vld [vmem:[%s680 + $0xc8] sm:$0xff]
        %v1068 = vld [vmem:[%s680 + $0xd0] sm:$0xff]
        %v1069 = vld [vmem:[%s680 + $0xd8] sm:$0xff]
        %v1070 = vld [vmem:[%s680 + $0xe0] sm:$0xff]
        %v1071 = vld [vmem:[%s680 + $0xe8] sm:$0xff]
        %v1072 = vld [vmem:[%s680 + $0xf0] sm:$0xff]
        %v1073 = vld [vmem:[%s680 + $0xf8] sm:$0xff]
        %v1074 = vld [vmem:[%s683] sm:$0x1]
        %v1076 = vperm.slane %v1074, 0
        %1078 = vmatpush.msra.mxu0 %v1057
        %1079 = vmatpush.msra.mxu0 %v1056
        %1080 = vmatpush.msra.mxu0 %v1055
        %1081 = vmatpush.msra.mxu0 %v1054
        %1082 = vmatpush.msra.mxu0 %v1053
        %1083 = vmatpush.msra.mxu0 %v1052
        %1084 = vmatpush.msra.mxu0 %v1051
        %1085 = vmatpush.msra.mxu0 %v1050
        %1086 = vmatpush.msra.mxu0 %v1049
        %1087 = vmatpush.msra.mxu0 %v1048
        %1088 = vmatpush.msra.mxu0 %v1047
        %1089 = vmatpush.msra.mxu0 %v1046
        %1090 = vmatpush.msra.mxu0 %v1045
        %1091 = vmatpush.msra.mxu0 %v1044
        %1092 = vmatpush.msra.mxu0 %v1043
        %1093 = vmatpush.msra.mxu0 %v1042
        %1094 = vmatmul.f32.gmra.mxu0 %v1040
        %v1095 = vpop.f32.mrf.mxu0
        %v1096 = vadd.f32 %v1076, %v1095
        %1097 = vdwg.mxu0
        %1098 = vmatpush.msra.mxu0 %v1073
        %1099 = vmatpush.msra.mxu0 %v1072
        %1100 = vmatpush.msra.mxu0 %v1071
        %1101 = vmatpush.msra.mxu0 %v1070
        %1102 = vmatpush.msra.mxu0 %v1069
        %1103 = vmatpush.msra.mxu0 %v1068
        %1104 = vmatpush.msra.mxu0 %v1067
        %1105 = vmatpush.msra.mxu0 %v1066
        %1106 = vmatpush.msra.mxu0 %v1065
        %1107 = vmatpush.msra.mxu0 %v1064
        %1108 = vmatpush.msra.mxu0 %v1063
        %1109 = vmatpush.msra.mxu0 %v1062
        %1110 = vmatpush.msra.mxu0 %v1061
        %1111 = vmatpush.msra.mxu0 %v1060
        %1112 = vmatpush.msra.mxu0 %v1059
        %1113 = vmatpush.msra.mxu0 %v1058
        %1114 = vmatmul.f32.gmra.mxu0 %v1041
        %v1115 = vpop.f32.mrf.mxu0
        %v1116 = vadd.f32 %v1096, %v1115
        %1117 = vdwg.mxu0
        %vm1118 = vcmask 7168
        %1119 = vst.msk [vmem:[%s690] sm:$0xff] %vm1118, %v1116
        %p1120 = scmp.lt.s32.totalorder %s32, 2
        %s1121 = scalar_select %p1120, %s32, 2
        %p1122 = scmp.lt.s32.totalorder %s31, 0
        %s1123 = scalar_select %p1122, %s31, 0
        %s1124 = sadd.s32 %s1123, %s1121
        %s1125 = smul.addr %s1124, 8
        %s1126 = scalar_lea.vmem %s13, %s1125
        // Predicated region
        $region77: #{_ensemble_forward_impl.1} parent=71 // pred_check
          %p1127 = pneg %p397
        $region78: #{_ensemble_forward_impl.1} parent=71 // pred_check_branch
          %1129 = sbr.rel (%p1127) target = $region80
        $region79: #{_ensemble_forward_impl.1} parent=71 // pred_region
          _
        $region80: #{_ensemble_forward_impl.1} parent=71 // pred_fallthru
          _
      $region72: #{_ensemble_forward_impl.1} parent=5 // pred_fallthru
        _
      %p1130 = scmp.le.s32.totalorder 2, %s22
      // Predicated region
      $region81: #{_ensemble_forward_impl.1} parent=5 // pred_check
        %p1131 = pneg %p1130
      $region82: #{_ensemble_forward_impl.1} parent=5 // pred_check_branch
        %1133 = sbr.rel (%p1131) target = $region84
      $region83: #{_ensemble_forward_impl.1} parent=5 // pred_region
        %s1134 = ssub.s32 %s22, 2
        // Predicated region
        $region85: #{_ensemble_forward_impl.1} parent=83 // pred_check
          %p1135 = pneg %p403
        $region86: #{_ensemble_forward_impl.1} parent=83 // pred_check_branch
          %1137 = sbr.rel (%p1135) target = $region88
        $region87: #{_ensemble_forward_impl.1} parent=83 // pred_region
          %p1138 = scmp.lt.s32.totalorder %s34, 2
          %s1139 = scalar_select %p1138, %s34, 2
          %p1140 = scmp.lt.s32.totalorder %s33, 0
          %s1141 = scalar_select %p1140, %s33, 0
          %s1142 = sadd.s32 %s1141, %s1139
          %s1143 = smul.addr %s1142, 8
          %s1144 = scalar_lea.vmem %s13, %s1143
        $region88: #{_ensemble_forward_impl.1} parent=83 // pred_fallthru
          _
      $region84: #{_ensemble_forward_impl.1} parent=5 // pred_fallthru
        _
    $region6: #{_ensemble_forward_impl.1} parent=1 // loop_footer
      %s26 = sadd.s32 1, %s22
    $region7: #{_ensemble_forward_impl.1} parent=1 // loop_footer_branch
      %21 = sbr.rel target = $region3
    $region8: #{_ensemble_forward_impl.1} parent=1 // loop_exit
      _
    %1145 = vsyncpa [#allocation3], 1
    %s1146 = scalar_lea.sflag [#allocation3], 1
    %1147 = vsyncpa %s1146, 1

</llo_original>
